<compile_context>
chip_gen: v7x
topology: tpu7x:2x2x1
jax: 0.10.0
libtpu: 0.0.40
codegen_flags: <defaults>
</compile_context>

<pallas_src>
import jax
import jax.numpy as jnp
from jax.experimental import pallas as pl
from jax.experimental.pallas import tpu as pltpu


STATE_DIM = 24           # BipedalWalkerHardcore-v3 observation dim
ACTION_DIM = 4           # BipedalWalkerHardcore-v3 action dim
SA_DIM = STATE_DIM + ACTION_DIM      # 28
H1, H2, OUT = 400, 300, 1            # real layer sizes

# Padded sizes. Features padded to 32 (clean bf16 sublane packing, tiny pad),
# hidden dims padded to lane-friendly multiples of 128.
IN_P, H1_P, H2_P = 32, 512, 384


def _critic_kernel(sa_ref,
                   w1_ref, b1_ref,
                   w2_ref, b2_ref,
                   w3_ref, b3_ref,
                   q_ref):
    # Input tile: (tile_b, 32) f32 -> bf16 for the MXU.
    x = sa_ref[...].astype(jnp.bfloat16)

    # Layer 1: (tile_b, 32) @ (32, 512) bf16 -> f32 acc, f32 bias + ReLU.
    h = jnp.dot(x, w1_ref[...], preferred_element_type=jnp.float32) + b1_ref[...]
    h = jnp.maximum(h, 0.0)

    # Layer 2: (tile_b, 512) @ (512, 384) bf16 -> f32 acc, f32 bias + ReLU.
    h = jnp.dot(h.astype(jnp.bfloat16), w2_ref[...],
                preferred_element_type=jnp.float32) + b2_ref[...]
    h = jnp.maximum(h, 0.0)

    # Layer 3 (300 -> 1): VPU broadcast-multiply by the real w3 row + XLU lane
    # reduce instead of a 128-wide padded MXU matmul.  Padded lanes of h and
    # w3 are exactly zero, so the sum equals the unpadded dot product.
    q = jnp.sum(h * w3_ref[...], axis=-1, keepdims=True) + b3_ref[...]

    q_ref[...] = q.astype(q_ref.dtype)


def pad_params(params):
    """Zero-pad (in, out)-layout params to the kernel's padded shapes.

    l1/l2 weights are stored bf16 (native MXU input); biases and the tiny
    l3 row/bias stay f32.  Zero padding keeps column 0 of the result
    bit-identical to the unpadded math (modulo the bf16 weight cast)."""
    def pad2(x, rows, cols, dtype):
        out = jnp.zeros((rows, cols), dtype)
        return out.at[: x.shape[0], : x.shape[1]].set(x.astype(dtype))

    return {
        "w1": pad2(params["w1"], IN_P, H1_P, jnp.bfloat16),
        "b1": pad2(params["b1"], 1, H1_P, jnp.float32),
        "w2": pad2(params["w2"], H1_P, H2_P, jnp.bfloat16),
        "b2": pad2(params["b2"], 1, H2_P, jnp.float32),
        "w3": pad2(params["w3"].T, 1, H2_P, jnp.float32),    # row vector (1, 384)
        "b3": params["b3"].astype(jnp.float32).reshape(1, 1),
    }


def _pick_tile_b(B):
    """Adaptive batch tile: >=2 tiles when the batch allows it (keeps both v7x
    TensorCores busy via the "parallel" grid axis); 256-row tiles for large
    batches to fill the 256-wide MXU on v6e/v7x; single small tile for tiny B."""
    if B >= 512:
        return 256
    if B >= 256:
        return 128
    if B > 64:
        return 64
    return max(8, ((B + 7) // 8) * 8)


def critic_forward(state, action, padded_params, *, tile_b=None):
    """state: (B, 24) f32, action: (B, 4) f32 -> Q: (B, 1) f32."""
    B = state.shape[0]
    if tile_b is None:
        tile_b = _pick_tile_b(B)

    sa = jnp.concatenate([state.astype(jnp.float32),
                          action.astype(jnp.float32)], axis=1)    # (B, 28)

    # Pad batch to a multiple of tile_b and features 28 -> 32 (cheap, ~B*32 f32).
    b_pad = ((B + tile_b - 1) // tile_b) * tile_b
    sa_p = jnp.zeros((b_pad, IN_P), jnp.float32).at[:B, :SA_DIM].set(sa)

    grid = (b_pad // tile_b,)

    # Constant index_map -> block stays resident in VMEM across grid steps.
    resident = lambda shape: pl.BlockSpec(shape, lambda i: (0, 0))

    flops = 2 * b_pad * (IN_P * H1_P + H1_P * H2_P + H2_P)
    param_bytes = (2 * (IN_P * H1_P + H1_P * H2_P)          # bf16 w1, w2
                   + 4 * (H1_P + 2 * H2_P + 1))             # f32 b1, b2, w3, b3
    io_bytes = 4 * b_pad * (IN_P + 1)

    q_p = pl.pallas_call(
        _critic_kernel,
        out_shape=jax.ShapeDtypeStruct((b_pad, 1), jnp.float32),
        grid_spec=pltpu.PrefetchScalarGridSpec(
            num_scalar_prefetch=0,
            grid=grid,
            in_specs=[
                pl.BlockSpec((tile_b, IN_P), lambda i: (i, 0)),
                resident((IN_P, H1_P)), resident((1, H1_P)),
                resident((H1_P, H2_P)), resident((1, H2_P)),
                resident((1, H2_P)), resident((1, 1)),
            ],
            out_specs=pl.BlockSpec((tile_b, 1), lambda i: (i, 0)),
        ),
        compiler_params=pltpu.CompilerParams(
            dimension_semantics=("parallel",),
        ),
        cost_estimate=pl.CostEstimate(
            flops=flops, transcendentals=0,
            bytes_accessed=param_bytes + io_bytes,
        ),
    )(sa_p,
      padded_params["w1"], padded_params["b1"],
      padded_params["w2"], padded_params["b2"],
      padded_params["w3"], padded_params["b3"])

    return q_p[:B, :]    # (B, 1)


def init_params(key):
    """Deterministic synthetic parameters (PyTorch-Linear-style uniform init),
    stored transposed as (in, out) for the kernel."""
    ks = jax.random.split(key, 6)

    def linear(kw, kb, fan_in, fan_out):
        bound = 1.0 / jnp.sqrt(fan_in)
        w = jax.random.uniform(kw, (fan_in, fan_out), jnp.float32, -bound, bound)
        b = jax.random.uniform(kb, (1, fan_out), jnp.float32, -bound, bound)
        return w, b

    w1, b1 = linear(ks[0], ks[1], SA_DIM, H1)
    w2, b2 = linear(ks[2], ks[3], H1, H2)
    w3, b3 = linear(ks[4], ks[5], H2, OUT)
    return {"w1": w1, "b1": b1, "w2": w2, "b2": b2, "w3": w3, "b3": b3}


def critic_forward_ref(state, action, params):
    """Pure-JAX f32 reference matching the PyTorch Critic.forward."""
    sa = jnp.concatenate([state, action], axis=1)
    q = jax.nn.relu(sa @ params["w1"] + params["b1"])
    q = jax.nn.relu(q @ params["w2"] + params["b2"])
    return q @ params["w3"] + params["b3"]


if __name__ == "__main__":
    key = jax.random.PRNGKey(0)
    pkey, skey, akey = jax.random.split(key, 3)

    params = init_params(pkey)
    padded = pad_params(params)          # pad/cast once; reuse across calls

    B = 2
    state = jax.random.normal(skey, (B, STATE_DIM), dtype=jnp.float32)
    action = jnp.tanh(jax.random.normal(akey, (B, ACTION_DIM), dtype=jnp.float32))

    q = critic_forward(state, action, padded)
    q = jax.block_until_ready(q)

    q_ref = critic_forward_ref(state, action, params)
    assert q.shape == (B, OUT)
    # bf16 weights/activations (f32 accumulation) -> tolerance loosened vs f32 ref.
    assert jnp.allclose(q, q_ref, atol=3e-2, rtol=3e-2), (q, q_ref)

    print("KERNEL_OK")
</pallas_src>

<mosaic_0001>
module attributes {stable_mosaic.version = 11 : i64} {
  func.func @_critic_kernel(%arg0: i32, %arg1: memref<8x32xf32, #tpu.memory_space<vmem>>, %arg2: memref<32x512xbf16, #tpu.memory_space<vmem>>, %arg3: memref<1x512xf32, #tpu.memory_space<vmem>>, %arg4: memref<512x384xbf16, #tpu.memory_space<vmem>>, %arg5: memref<1x384xf32, #tpu.memory_space<vmem>>, %arg6: memref<1x384xf32, #tpu.memory_space<vmem>>, %arg7: memref<1x1xf32, #tpu.memory_space<vmem>>, %arg8: memref<8x1xf32, #tpu.memory_space<vmem>>) attributes {dimension_semantics = [#tpu.dimension_semantics<parallel>], iteration_bounds = array<i64: 1>, scalar_prefetch = 0 : i64, scratch_operands = 0 : i64, tpu.core_type = #tpu.core_type<tc>, window_params = [{transform_indices = @transform_0, window_bounds = array<i64: 8, 32>}, {pipeline_mode = #tpu.pipeline_mode<synchronous>, transform_indices = @transform_1, window_bounds = array<i64: 32, 512>}, {pipeline_mode = #tpu.pipeline_mode<synchronous>, transform_indices = @transform_2, window_bounds = array<i64: 1, 512>}, {pipeline_mode = #tpu.pipeline_mode<synchronous>, transform_indices = @transform_3, window_bounds = array<i64: 512, 384>}, {pipeline_mode = #tpu.pipeline_mode<synchronous>, transform_indices = @transform_4, window_bounds = array<i64: 1, 384>}, {pipeline_mode = #tpu.pipeline_mode<synchronous>, transform_indices = @transform_5, window_bounds = array<i64: 1, 384>}, {pipeline_mode = #tpu.pipeline_mode<synchronous>, transform_indices = @transform_6, window_bounds = array<i64: 1, 1>}, {transform_indices = @transform_7, window_bounds = array<i64: 8, 1>}]} {
    %c0 = arith.constant 0 : index
    %c0_0 = arith.constant 0 : index
    %0 = vector.load %arg1[%c0, %c0_0] : memref<8x32xf32, #tpu.memory_space<vmem>>, vector<8x32xf32>
    %1 = arith.truncf %0 : vector<8x32xf32> to vector<8x32xbf16>
    %c0_1 = arith.constant 0 : index
    %c0_2 = arith.constant 0 : index
    %2 = vector.load %arg2[%c0_1, %c0_2] : memref<32x512xbf16, #tpu.memory_space<vmem>>, vector<32x512xbf16>
    %cst = arith.constant dense<0.000000e+00> : vector<8x512xf32>
    %3 = tpu.matmul %1, %2, %cst {dimension_numbers = #tpu.dot_dimension_numbers<[1], [0], [0], [1], [0, 0, 1, 1], [], []>} : vector<8x32xbf16>, vector<32x512xbf16>, vector<8x512xf32> -> vector<8x512xf32>
    %c0_3 = arith.constant 0 : index
    %c0_4 = arith.constant 0 : index
    %4 = vector.load %arg3[%c0_3, %c0_4] : memref<1x512xf32, #tpu.memory_space<vmem>>, vector<1x512xf32>
    %5 = vector.broadcast %4 : vector<1x512xf32> to vector<8x512xf32>
    %6 = arith.addf %3, %5 : vector<8x512xf32>
    %cst_5 = arith.constant 0.000000e+00 : f32
    %7 = vector.broadcast %cst_5 : f32 to vector<8x512xf32>
    %8 = arith.maximumf %6, %7 : vector<8x512xf32>
    %9 = arith.truncf %8 : vector<8x512xf32> to vector<8x512xbf16>
    %c0_6 = arith.constant 0 : index
    %c0_7 = arith.constant 0 : index
    %10 = vector.load %arg4[%c0_6, %c0_7] : memref<512x384xbf16, #tpu.memory_space<vmem>>, vector<512x384xbf16>
    %cst_8 = arith.constant dense<0.000000e+00> : vector<8x384xf32>
    %11 = tpu.matmul %9, %10, %cst_8 {dimension_numbers = #tpu.dot_dimension_numbers<[1], [0], [0], [1], [0, 0, 1, 1], [], []>} : vector<8x512xbf16>, vector<512x384xbf16>, vector<8x384xf32> -> vector<8x384xf32>
    %c0_9 = arith.constant 0 : index
    %c0_10 = arith.constant 0 : index
    %12 = vector.load %arg5[%c0_9, %c0_10] : memref<1x384xf32, #tpu.memory_space<vmem>>, vector<1x384xf32>
    %13 = vector.broadcast %12 : vector<1x384xf32> to vector<8x384xf32>
    %14 = arith.addf %11, %13 : vector<8x384xf32>
    %cst_11 = arith.constant 0.000000e+00 : f32
    %15 = vector.broadcast %cst_11 : f32 to vector<8x384xf32>
    %16 = arith.maximumf %14, %15 : vector<8x384xf32>
    %c0_12 = arith.constant 0 : index
    %c0_13 = arith.constant 0 : index
    %17 = vector.load %arg6[%c0_12, %c0_13] : memref<1x384xf32, #tpu.memory_space<vmem>>, vector<1x384xf32>
    %18 = vector.broadcast %17 : vector<1x384xf32> to vector<8x384xf32>
    %19 = arith.mulf %16, %18 : vector<8x384xf32>
    %cst_14 = arith.constant dense<0.000000e+00> : vector<8xf32>
    %20 = vector.multi_reduction <add>, %19, %cst_14 [1] : vector<8x384xf32> to vector<8xf32>
    %21 = vector.shape_cast %20 : vector<8xf32> to vector<8x1xf32>
    %c0_15 = arith.constant 0 : index
    %c0_16 = arith.constant 0 : index
    %22 = vector.load %arg7[%c0_15, %c0_16] : memref<1x1xf32, #tpu.memory_space<vmem>>, vector<1x1xf32>
    %23 = vector.broadcast %22 : vector<1x1xf32> to vector<8x1xf32>
    %24 = arith.addf %21, %23 : vector<8x1xf32>
    %c0_17 = arith.constant 0 : index
    %c0_18 = arith.constant 0 : index
    %25 = vector.load %arg8[%c0_17, %c0_18] : memref<8x1xf32, #tpu.memory_space<vmem>>, vector<8x1xf32>
    tpu.vector_store %arg8[%c0_17, %c0_18], %24 {strides = array<i32>} : memref<8x1xf32, #tpu.memory_space<vmem>>, vector<8x1xf32>,
    return
  }
  func.func @transform_0(%arg0: i32) -> (i32, i32) {
    %c0_i32 = arith.constant 0 : i32
    %c0_i32_0 = arith.constant 0 : i32
    return %arg0, %c0_i32 : i32, i32
  }
  func.func @transform_1(%arg0: i32) -> (i32, i32) {
    %c0_i32 = arith.constant 0 : i32
    %c0_i32_0 = arith.constant 0 : i32
    %c0_i32_1 = arith.constant 0 : i32
    return %c0_i32, %c0_i32_0 : i32, i32
  }
  func.func @transform_2(%arg0: i32) -> (i32, i32) {
    %c0_i32 = arith.constant 0 : i32
    %c0_i32_0 = arith.constant 0 : i32
    %c0_i32_1 = arith.constant 0 : i32
    return %c0_i32, %c0_i32_0 : i32, i32
  }
  func.func @transform_3(%arg0: i32) -> (i32, i32) {
    %c0_i32 = arith.constant 0 : i32
    %c0_i32_0 = arith.constant 0 : i32
    %c0_i32_1 = arith.constant 0 : i32
    return %c0_i32, %c0_i32_0 : i32, i32
  }
  func.func @transform_4(%arg0: i32) -> (i32, i32) {
    %c0_i32 = arith.constant 0 : i32
    %c0_i32_0 = arith.constant 0 : i32
    %c0_i32_1 = arith.constant 0 : i32
    return %c0_i32, %c0_i32_0 : i32, i32
  }
  func.func @transform_5(%arg0: i32) -> (i32, i32) {
    %c0_i32 = arith.constant 0 : i32
    %c0_i32_0 = arith.constant 0 : i32
    %c0_i32_1 = arith.constant 0 : i32
    return %c0_i32, %c0_i32_0 : i32, i32
  }
  func.func @transform_6(%arg0: i32) -> (i32, i32) {
    %c0_i32 = arith.constant 0 : i32
    %c0_i32_0 = arith.constant 0 : i32
    %c0_i32_1 = arith.constant 0 : i32
    return %c0_i32, %c0_i32_0 : i32, i32
  }
  func.func @transform_7(%arg0: i32) -> (i32, i32) {
    %c0_i32 = arith.constant 0 : i32
    %c0_i32_0 = arith.constant 0 : i32
    return %arg0, %c0_i32 : i32, i32
  }
}

</mosaic_0001>

<llo_original>
// kernel: tpu_custom_call.1
$region0: #{tpu_custom_call.1}
  #allocation0 [shape = 'u32[]', space=smem, size = 0x4, offset = 0x4, fixed_abs, tag = 'smem constant byte address 0x4 - core index']
  #allocation1 [shape = 'u32[144,128]{1,0:T(1,128)}', space=vmem, size = 0x12000, scoped, tag = 'internal scratch']
  #allocation2 [shape = 'f32[1,1]{1,0:T(1,128)S(1)}', space=vmem, size = 0x200, scoped, tag = 'scoped memory for tpu_custom_call.1']
  %s0 = inlined_call_operand.hbm [shape: f32[8,32], index: 0, kind: input, shape index: {}]
  %s1 = inlined_call_operand.hbm [shape: bf16[32,512], index: 1, kind: input, shape index: {}]
  %s2 = inlined_call_operand.vmem [shape: f32[1,512], index: 2, kind: input, shape index: {}]
  %s3 = inlined_call_operand.hbm [shape: bf16[512,384], index: 3, kind: input, shape index: {}]
  %s4 = inlined_call_operand.vmem [shape: f32[1,384], index: 4, kind: input, shape index: {}]
  %s5 = inlined_call_operand.vmem [shape: f32[1,384], index: 5, kind: input, shape index: {}]
  %s6 = inlined_call_operand.<no memory space> [shape: f32[1,1], index: 6, kind: input, shape index: {}]
  %s7 = inlined_call_operand.vmem [shape: f32[8,1], index: 7, kind: output, shape index: {}]
  %s8 = sld [smem:[#allocation0]]
  $region50: #{tpu_custom_call.1} parent=0
    _
  %s10 = ssub.s32 1, %s8
  %s11 = scalar_select 0, %s10, %s8
  %v12 = vstv %s6
  %13 = vst [vmem:[#allocation2] sm:$0x1] %v12
  $region1: #{tpu_custom_call.1} parent=0
    #allocation3 [shape = 'u8[4096]{0}', space=vmem, size = 0x1000, scoped, tag = 'input window, operand 0, single buffered']
    #allocation4 [shape = 's32[1]{0}', space=sflag, size = 0x4, scoped, tag = 'scoped memory for tpu_custom_call.1']
    #allocation5 [shape = 'u8[32768]{0}', space=vmem, size = 0x8000, scoped, tag = 'input window, operand 1, single buffered']
    #allocation6 [shape = 's32[1]{0}', space=sflag, size = 0x4, scoped, tag = 'scoped memory for tpu_custom_call.1']
    #allocation7 [shape = 'u8[393216]{0}', space=vmem, size = 0x60000, scoped, tag = 'input window, operand 3, single buffered']
    %14 = vsyncpa [#allocation4], 0
    %15 = vsyncpa [#allocation6], 0
    // Predicated region
    $region2: #{tpu_custom_call.1} parent=1 // pred_check
      _
    $region3: #{tpu_custom_call.1} parent=1 // pred_check_branch
      %17 = sbr.rel (0) target = $region5
    $region4: #{tpu_custom_call.1} parent=1 // pred_region
      %s19 = ssub.s32 128, 128
      %20 = vsyncadd [#allocation4], %s19
      %s22 = sshll.u32 [#allocation3], 4
      %s23 = int_to_ptr.vmem [resolvable:$true] %s22
      %25 = dma.hbm_to_vmem [thread:$0]  %s0, 128, %s23, [#allocation4]
    $region5: #{tpu_custom_call.1} parent=1 // pred_fallthru
      _
    // Predicated region
    $region6: #{tpu_custom_call.1} parent=1 // pred_check
      _
    $region7: #{tpu_custom_call.1} parent=1 // pred_check_branch
      %27 = sbr.rel (0) target = $region9
    $region8: #{tpu_custom_call.1} parent=1 // pred_region
      %s29 = ssub.s32 1024, 1024
      %30 = vsyncadd [#allocation6], %s29
      %s31 = sshll.u32 [#allocation5], 4
      %s32 = int_to_ptr.vmem [resolvable:$true] %s31
      %37 = dma.hbm_to_vmem [thread:$0]  %s1, 1024, %s32, [#allocation6], 256, 256, 16
    $region9: #{tpu_custom_call.1} parent=1 // pred_fallthru
      _
    // Predicated region
    $region10: #{tpu_custom_call.1} parent=1 // pred_check
      _
    $region11: #{tpu_custom_call.1} parent=1 // pred_check_branch
      %39 = sbr.rel (0) target = $region13
    $region12: #{tpu_custom_call.1} parent=1 // pred_region
      _
    $region13: #{tpu_custom_call.1} parent=1 // pred_fallthru
      _
    // Predicated region
    $region14: #{tpu_custom_call.1} parent=1 // pred_check
      _
    $region15: #{tpu_custom_call.1} parent=1 // pred_check_branch
      %41 = sbr.rel (0) target = $region17
    $region16: #{tpu_custom_call.1} parent=1 // pred_region
      %s43 = ssub.s32 12288, 12288
      %44 = vsyncadd [#allocation6], %s43
      %s45 = sshll.u32 [#allocation7], 4
      %s46 = int_to_ptr.vmem [resolvable:$true] %s45
      %51 = dma.hbm_to_vmem [thread:$0]  %s3, 12288, %s46, [#allocation6], 192, 192, 12
    $region17: #{tpu_custom_call.1} parent=1 // pred_fallthru
      _
    // Predicated region
    $region18: #{tpu_custom_call.1} parent=1 // pred_check
      _
    $region19: #{tpu_custom_call.1} parent=1 // pred_check_branch
      %53 = sbr.rel (0) target = $region21
    $region20: #{tpu_custom_call.1} parent=1 // pred_region
      _
    $region21: #{tpu_custom_call.1} parent=1 // pred_fallthru
      _
    // Predicated region
    $region22: #{tpu_custom_call.1} parent=1 // pred_check
      _
    $region23: #{tpu_custom_call.1} parent=1 // pred_check_branch
      %55 = sbr.rel (0) target = $region25
    $region24: #{tpu_custom_call.1} parent=1 // pred_region
      _
    $region25: #{tpu_custom_call.1} parent=1 // pred_fallthru
      _
    // Predicated region
    $region26: #{tpu_custom_call.1} parent=1 // pred_check
      _
    $region27: #{tpu_custom_call.1} parent=1 // pred_check_branch
      %57 = sbr.rel (0) target = $region29
    $region28: #{tpu_custom_call.1} parent=1 // pred_region
      _
    $region29: #{tpu_custom_call.1} parent=1 // pred_fallthru
      _
    // Predicated region
    $region30: #{tpu_custom_call.1} parent=1 // pred_check
      _
    $region31: #{tpu_custom_call.1} parent=1 // pred_check_branch
      %59 = sbr.rel (0) target = $region33
    $region32: #{tpu_custom_call.1} parent=1 // pred_region
      %60 = dma.done [#allocation4], 128
    $region33: #{tpu_custom_call.1} parent=1 // pred_fallthru
      _
    // Predicated region
    $region34: #{tpu_custom_call.1} parent=1 // pred_check
      _
    $region35: #{tpu_custom_call.1} parent=1 // pred_check_branch
      %62 = sbr.rel (0) target = $region37
    $region36: #{tpu_custom_call.1} parent=1 // pred_region
      %63 = dma.done [#allocation6], 1024
    $region37: #{tpu_custom_call.1} parent=1 // pred_fallthru
      _
    // Predicated region
    $region38: #{tpu_custom_call.1} parent=1 // pred_check
      _
    $region39: #{tpu_custom_call.1} parent=1 // pred_check_branch
      %65 = sbr.rel (0) target = $region41
    $region40: #{tpu_custom_call.1} parent=1 // pred_region
      %66 = dma.done [#allocation6], 12288
    $region41: #{tpu_custom_call.1} parent=1 // pred_fallthru
      _
    %v68 = vld [vmem:[#allocation3] sm:$0xff]
    %v69 = vpack.c.bf16 %v68, %v68
    %v70 = vld [vmem:[#allocation5] sm:$0xff]
    %v71 = vld [vmem:[#allocation5 + $0x8] sm:$0xff]
    %v72 = vld [vmem:[#allocation5 + $0x10] sm:$0xff]
    %v73 = vld [vmem:[#allocation5 + $0x18] sm:$0xff]
    %v74 = vld [vmem:[#allocation5 + $0x20] sm:$0xff]
    %v75 = vld [vmem:[#allocation5 + $0x28] sm:$0xff]
    %v76 = vld [vmem:[#allocation5 + $0x30] sm:$0xff]
    %v77 = vld [vmem:[#allocation5 + $0x38] sm:$0xff]
    %v78 = vld [vmem:[%s2] sm:$0xf]
    %v80 = vlaneseq
    %v81 = vshrl.u32 %v80, 7
    %v82 = vsub.s32 0, %v81
    %v83 = vrot.slane %v78, %v82
    %v84 = vlaneseq
    %v85 = vshrl.u32 %v84, 7
    %v86 = vsub.s32 1, %v85
    %v87 = vrot.slane %v78, %v86
    %v88 = vlaneseq
    %v89 = vshrl.u32 %v88, 7
    %v90 = vsub.s32 2, %v89
    %v91 = vrot.slane %v78, %v90
    %v92 = vlaneseq
    %v93 = vshrl.u32 %v92, 7
    %v94 = vsub.s32 3, %v93
    %v95 = vrot.slane %v78, %v94
    %v108 = vunpack.c.l.b16 %v70
    %v109 = vunpack.c.h.b16 %v70
    %v110 = vunpack.c.l.b16 %v71
    %v111 = vunpack.c.h.b16 %v71
    %v112 = vunpack.c.l.b16 %v72
    %v113 = vunpack.c.h.b16 %v72
    %v114 = vunpack.c.l.b16 %v73
    %v115 = vunpack.c.h.b16 %v73
    %v116 = vunpack.c.l.b16 %v74
    %v117 = vunpack.c.h.b16 %v74
    %v118 = vunpack.c.l.b16 %v75
    %v119 = vunpack.c.h.b16 %v75
    %v120 = vunpack.c.l.b16 %v76
    %v121 = vunpack.c.h.b16 %v76
    %v122 = vunpack.c.l.b16 %v77
    %v123 = vunpack.c.h.b16 %v77
    %v124 = vpack.c.b16 %v112, %v108
    %v125 = vpack.c.b16 %v113, %v109
    %v126 = vpack.c.b16 %v114, %v110
    %v127 = vpack.c.b16 %v115, %v111
    %v128 = vpack.c.b16 %v120, %v116
    %v129 = vpack.c.b16 %v121, %v117
    %v130 = vpack.c.b16 %v122, %v118
    %v131 = vpack.c.b16 %v123, %v119
    %vm140 = vcmask 261120
    %v142 = vsel %vm140, %v69, 0
    %144 = vmatprep.subr.bf16.mxu0 %v125
    %145 = vmatpush1.bf16.msra.mxu0 %v124
    %146 = vmatprep.subr.bf16.mxu0 %v129
    %147 = vmatpush1.bf16.msra.mxu0 %v128
    %148 = vmatprep.subr.bf16.mxu0 0
    %149 = vmatpush1.bf16.msra.mxu0 0
    %150 = vmatprep.subr.bf16.mxu0 0
    %151 = vmatpush1.bf16.msra.mxu0 0
    %152 = vmatprep.subr.bf16.mxu0 0
    %153 = vmatpush1.bf16.msra.mxu0 0
    %154 = vmatprep.subr.bf16.mxu0 0
    %155 = vmatpush1.bf16.msra.mxu0 0
    %156 = vmatprep.subr.bf16.mxu0 0
    %157 = vmatpush1.bf16.msra.mxu0 0
    %158 = vmatprep.subr.bf16.mxu0 0
    %159 = vmatpush1.bf16.msra.mxu0 0
    %160 = vmatprep.subr.bf16.mxu0 0
    %161 = vmatpush1.bf16.msra.mxu0 0
    %162 = vmatprep.subr.bf16.mxu0 0
    %163 = vmatpush1.bf16.msra.mxu0 0
    %164 = vmatprep.subr.bf16.mxu0 0
    %165 = vmatpush1.bf16.msra.mxu0 0
    %166 = vmatprep.subr.bf16.mxu0 0
    %167 = vmatpush1.bf16.msra.mxu0 0
    %168 = vmatprep.subr.bf16.mxu0 0
    %169 = vmatpush1.bf16.msra.mxu0 0
    %170 = vmatprep.subr.bf16.mxu0 0
    %171 = vmatpush1.bf16.msra.mxu0 0
    %172 = vmatprep.subr.bf16.mxu0 0
    %173 = vmatpush1.bf16.msra.mxu0 0
    %174 = vmatprep.subr.bf16.mxu0 0
    %175 = vmatpush1.bf16.msra.mxu0 0
    %176 = vmatprep.mubr.bf16.mxu0 0
    %177 = vmatmul.mubr.bf16.gmra.mrb[0].mxu0 %v142
    %v178 = vpop.f32.mrb[0].mxu0
    %v179 = vadd.f32 %v83, %v178
    %v180 = vpop.f32.mrb[0].mxu0
    %v181 = vadd.f32 %v87, %v180
    %v182 = vpop.f32.mrb[0].mxu0
    %v183 = vpop.f32.mrb[0].mxu0
    %184 = vdwg.mxu0
    %185 = vmatprep.subr.bf16.mxu0 %v127
    %186 = vmatpush1.bf16.msra.mxu0 %v126
    %187 = vmatprep.subr.bf16.mxu0 %v131
    %188 = vmatpush1.bf16.msra.mxu0 %v130
    %189 = vmatprep.subr.bf16.mxu0 0
    %190 = vmatpush1.bf16.msra.mxu0 0
    %191 = vmatprep.subr.bf16.mxu0 0
    %192 = vmatpush1.bf16.msra.mxu0 0
    %193 = vmatprep.subr.bf16.mxu0 0
    %194 = vmatpush1.bf16.msra.mxu0 0
    %195 = vmatprep.subr.bf16.mxu0 0
    %196 = vmatpush1.bf16.msra.mxu0 0
    %197 = vmatprep.subr.bf16.mxu0 0
    %198 = vmatpush1.bf16.msra.mxu0 0
    %199 = vmatprep.subr.bf16.mxu0 0
    %200 = vmatpush1.bf16.msra.mxu0 0
    %201 = vmatprep.subr.bf16.mxu0 0
    %202 = vmatpush1.bf16.msra.mxu0 0
    %203 = vmatprep.subr.bf16.mxu0 0
    %204 = vmatpush1.bf16.msra.mxu0 0
    %205 = vmatprep.subr.bf16.mxu0 0
    %206 = vmatpush1.bf16.msra.mxu0 0
    %207 = vmatprep.subr.bf16.mxu0 0
    %208 = vmatpush1.bf16.msra.mxu0 0
    %209 = vmatprep.subr.bf16.mxu0 0
    %210 = vmatpush1.bf16.msra.mxu0 0
    %211 = vmatprep.subr.bf16.mxu0 0
    %212 = vmatpush1.bf16.msra.mxu0 0
    %213 = vmatprep.subr.bf16.mxu0 0
    %214 = vmatpush1.bf16.msra.mxu0 0
    %215 = vmatprep.subr.bf16.mxu0 0
    %216 = vmatpush1.bf16.msra.mxu0 0
    %217 = vmatprep.mubr.bf16.mxu0 0
    %218 = vmatmul.mubr.bf16.gmra.mrb[0].mxu0 %v142
    %v219 = vpop.f32.mrb[0].mxu0
    %v220 = vadd.f32 %v91, %v219
    %v221 = vpop.f32.mrb[0].mxu0
    %v222 = vadd.f32 %v95, %v221
    %v223 = vpop.f32.mrb[0].mxu0
    %v224 = vpop.f32.mrb[0].mxu0
    %225 = vdwg.mxu0
    %v226 = vmax.f32 %v179, 0.0
    %v227 = vmax.f32 %v181, 0.0
    %v228 = vmax.f32 %v220, 0.0
    %v229 = vmax.f32 %v222, 0.0
    %v230 = vpack.c.bf16 %v226, %v226
    %v231 = vpack.c.bf16 %v227, %v227
    %v232 = vpack.c.bf16 %v228, %v228
    %v233 = vpack.c.bf16 %v229, %v229
    %v234 = vld [vmem:[#allocation7] sm:$0xff]
    %v235 = vld [vmem:[#allocation7 + $0x8] sm:$0xf]
    %v236 = vld [vmem:[#allocation7 + $0xc] sm:$0xff]
    %v237 = vld [vmem:[#allocation7 + $0x14] sm:$0xf]
    %v238 = vld [vmem:[#allocation7 + $0x18] sm:$0xff]
    %v239 = vld [vmem:[#allocation7 + $0x20] sm:$0xf]
    %v240 = vld [vmem:[#allocation7 + $0x24] sm:$0xff]
    %v241 = vld [vmem:[#allocation7 + $0x2c] sm:$0xf]
    %v242 = vld [vmem:[#allocation7 + $0x30] sm:$0xff]
    %v243 = vld [vmem:[#allocation7 + $0x38] sm:$0xf]
    %v244 = vld [vmem:[#allocation7 + $0x3c] sm:$0xff]
    %v245 = vld [vmem:[#allocation7 + $0x44] sm:$0xf]
    %v246 = vld [vmem:[#allocation7 + $0x48] sm:$0xff]
    %v247 = vld [vmem:[#allocation7 + $0x50] sm:$0xf]
    %v248 = vld [vmem:[#allocation7 + $0x54] sm:$0xff]
    %v249 = vld [vmem:[#allocation7 + $0x5c] sm:$0xf]
    %v250 = vld [vmem:[#allocation7 + $0x60] sm:$0xff]
    %v251 = vld [vmem:[#allocation7 + $0x68] sm:$0xf]
    %v252 = vld [vmem:[#allocation7 + $0x6c] sm:$0xff]
    %v253 = vld [vmem:[#allocation7 + $0x74] sm:$0xf]
    %v254 = vld [vmem:[#allocation7 + $0x78] sm:$0xff]
    %v255 = vld [vmem:[#allocation7 + $0x80] sm:$0xf]
    %v256 = vld [vmem:[#allocation7 + $0x84] sm:$0xff]
    %v257 = vld [vmem:[#allocation7 + $0x8c] sm:$0xf]
    %v258 = vld [vmem:[#allocation7 + $0x90] sm:$0xff]
    %v259 = vld [vmem:[#allocation7 + $0x98] sm:$0xf]
    %v260 = vld [vmem:[#allocation7 + $0x9c] sm:$0xff]
    %v261 = vld [vmem:[#allocation7 + $0xa4] sm:$0xf]
    %v262 = vld [vmem:[#allocation7 + $0xa8] sm:$0xff]
    %v263 = vld [vmem:[#allocation7 + $0xb0] sm:$0xf]
    %v264 = vld [vmem:[#allocation7 + $0xb4] sm:$0xff]
    %v265 = vld [vmem:[#allocation7 + $0xbc] sm:$0xf]
    %v266 = vld [vmem:[#allocation7 + $0xc0] sm:$0xff]
    %v267 = vld [vmem:[#allocation7 + $0xc8] sm:$0xf]
    %v268 = vld [vmem:[#allocation7 + $0xcc] sm:$0xff]
    %v269 = vld [vmem:[#allocation7 + $0xd4] sm:$0xf]
    %v270 = vld [vmem:[#allocation7 + $0xd8] sm:$0xff]
    %v271 = vld [vmem:[#allocation7 + $0xe0] sm:$0xf]
    %v272 = vld [vmem:[#allocation7 + $0xe4] sm:$0xff]
    %v273 = vld [vmem:[#allocation7 + $0xec] sm:$0xf]
    %v274 = vld [vmem:[#allocation7 + $0xf0] sm:$0xff]
    %v275 = vld [vmem:[#allocation7 + $0xf8] sm:$0xf]
    %v276 = vld [vmem:[#allocation7 + $0xfc] sm:$0xff]
    %v277 = vld [vmem:[#allocation7 + $0x104] sm:$0xf]
    %v278 = vld [vmem:[#allocation7 + $0x108] sm:$0xff]
    %v279 = vld [vmem:[#allocation7 + $0x110] sm:$0xf]
    %v280 = vld [vmem:[#allocation7 + $0x114] sm:$0xff]
    %v281 = vld [vmem:[#allocation7 + $0x11c] sm:$0xf]
    %v282 = vld [vmem:[#allocation7 + $0x120] sm:$0xff]
    %v283 = vld [vmem:[#allocation7 + $0x128] sm:$0xf]
    %v284 = vld [vmem:[#allocation7 + $0x12c] sm:$0xff]
    %v285 = vld [vmem:[#allocation7 + $0x134] sm:$0xf]
    %v286 = vld [vmem:[#allocation7 + $0x138] sm:$0xff]
    %v287 = vld [vmem:[#allocation7 + $0x140] sm:$0xf]
    %v288 = vld [vmem:[#allocation7 + $0x144] sm:$0xff]
    %v289 = vld [vmem:[#allocation7 + $0x14c] sm:$0xf]
    %v290 = vld [vmem:[#allocation7 + $0x150] sm:$0xff]
    %v291 = vld [vmem:[#allocation7 + $0x158] sm:$0xf]
    %v292 = vld [vmem:[#allocation7 + $0x15c] sm:$0xff]
    %v293 = vld [vmem:[#allocation7 + $0x164] sm:$0xf]
    %v294 = vld [vmem:[#allocation7 + $0x168] sm:$0xff]
    %v295 = vld [vmem:[#allocation7 + $0x170] sm:$0xf]
    %v296 = vld [vmem:[#allocation7 + $0x174] sm:$0xff]
    %v297 = vld [vmem:[#allocation7 + $0x17c] sm:$0xf]
    %v298 = vld [vmem:[#allocation7 + $0x180] sm:$0xff]
    %v299 = vld [vmem:[#allocation7 + $0x188] sm:$0xf]
    %v300 = vld [vmem:[#allocation7 + $0x18c] sm:$0xff]
    %v301 = vld [vmem:[#allocation7 + $0x194] sm:$0xf]
    %v302 = vld [vmem:[#allocation7 + $0x198] sm:$0xff]
    %v303 = vld [vmem:[#allocation7 + $0x1a0] sm:$0xf]
    %v304 = vld [vmem:[#allocation7 + $0x1a4] sm:$0xff]
    %v305 = vld [vmem:[#allocation7 + $0x1ac] sm:$0xf]
    %v306 = vld [vmem:[#allocation7 + $0x1b0] sm:$0xff]
    %v307 = vld [vmem:[#allocation7 + $0x1b8] sm:$0xf]
    %v308 = vld [vmem:[#allocation7 + $0x1bc] sm:$0xff]
    %v309 = vld [vmem:[#allocation7 + $0x1c4] sm:$0xf]
    %v310 = vld [vmem:[#allocation7 + $0x1c8] sm:$0xff]
    %v311 = vld [vmem:[#allocation7 + $0x1d0] sm:$0xf]
    %v312 = vld [vmem:[#allocation7 + $0x1d4] sm:$0xff]
    %v313 = vld [vmem:[#allocation7 + $0x1dc] sm:$0xf]
    %v314 = vld [vmem:[#allocation7 + $0x1e0] sm:$0xff]
    %v315 = vld [vmem:[#allocation7 + $0x1e8] sm:$0xf]
    %v316 = vld [vmem:[#allocation7 + $0x1ec] sm:$0xff]
    %v317 = vld [vmem:[#allocation7 + $0x1f4] sm:$0xf]
    %v318 = vld [vmem:[#allocation7 + $0x1f8] sm:$0xff]
    %v319 = vld [vmem:[#allocation7 + $0x200] sm:$0xf]
    %v320 = vld [vmem:[#allocation7 + $0x204] sm:$0xff]
    %v321 = vld [vmem:[#allocation7 + $0x20c] sm:$0xf]
    %v322 = vld [vmem:[#allocation7 + $0x210] sm:$0xff]
    %v323 = vld [vmem:[#allocation7 + $0x218] sm:$0xf]
    %v324 = vld [vmem:[#allocation7 + $0x21c] sm:$0xff]
    %v325 = vld [vmem:[#allocation7 + $0x224] sm:$0xf]
    %v326 = vld [vmem:[#allocation7 + $0x228] sm:$0xff]
    %v327 = vld [vmem:[#allocation7 + $0x230] sm:$0xf]
    %v328 = vld [vmem:[#allocation7 + $0x234] sm:$0xff]
    %v329 = vld [vmem:[#allocation7 + $0x23c] sm:$0xf]
    %v330 = vld [vmem:[#allocation7 + $0x240] sm:$0xff]
    %v331 = vld [vmem:[#allocation7 + $0x248] sm:$0xf]
    %v332 = vld [vmem:[#allocation7 + $0x24c] sm:$0xff]
    %v333 = vld [vmem:[#allocation7 + $0x254] sm:$0xf]
    %v334 = vld [vmem:[#allocation7 + $0x258] sm:$0xff]
    %v335 = vld [vmem:[#allocation7 + $0x260] sm:$0xf]
    %v336 = vld [vmem:[#allocation7 + $0x264] sm:$0xff]
    %v337 = vld [vmem:[#allocation7 + $0x26c] sm:$0xf]
    %v338 = vld [vmem:[#allocation7 + $0x270] sm:$0xff]
    %v339 = vld [vmem:[#allocation7 + $0x278] sm:$0xf]
    %v340 = vld [vmem:[#allocation7 + $0x27c] sm:$0xff]
    %v341 = vld [vmem:[#allocation7 + $0x284] sm:$0xf]
    %v342 = vld [vmem:[#allocation7 + $0x288] sm:$0xff]
    %v343 = vld [vmem:[#allocation7 + $0x290] sm:$0xf]
    %v344 = vld [vmem:[#allocation7 + $0x294] sm:$0xff]
    %v345 = vld [vmem:[#allocation7 + $0x29c] sm:$0xf]
    %v346 = vld [vmem:[#allocation7 + $0x2a0] sm:$0xff]
    %v347 = vld [vmem:[#allocation7 + $0x2a8] sm:$0xf]
    %v348 = vld [vmem:[#allocation7 + $0x2ac] sm:$0xff]
    %v349 = vld [vmem:[#allocation7 + $0x2b4] sm:$0xf]
    %v350 = vld [vmem:[#allocation7 + $0x2b8] sm:$0xff]
    %v351 = vld [vmem:[#allocation7 + $0x2c0] sm:$0xf]
    %v352 = vld [vmem:[#allocation7 + $0x2c4] sm:$0xff]
    %v353 = vld [vmem:[#allocation7 + $0x2cc] sm:$0xf]
    %v354 = vld [vmem:[#allocation7 + $0x2d0] sm:$0xff]
    %v355 = vld [vmem:[#allocation7 + $0x2d8] sm:$0xf]
    %v356 = vld [vmem:[#allocation7 + $0x2dc] sm:$0xff]
    %v357 = vld [vmem:[#allocation7 + $0x2e4] sm:$0xf]
    %v358 = vld [vmem:[#allocation7 + $0x2e8] sm:$0xff]
    %v359 = vld [vmem:[#allocation7 + $0x2f0] sm:$0xf]
    %v360 = vld [vmem:[#allocation7 + $0x2f4] sm:$0xff]
    %v361 = vld [vmem:[#allocation7 + $0x2fc] sm:$0xf]
    %v362 = vld [vmem:[%s4] sm:$0x7]
    %v364 = vlaneseq
    %v365 = vshrl.u32 %v364, 7
    %v366 = vsub.s32 0, %v365
    %v367 = vrot.slane %v362, %v366
    %v368 = vlaneseq
    %v369 = vshrl.u32 %v368, 7
    %v370 = vsub.s32 1, %v369
    %v371 = vrot.slane %v362, %v370
    %v372 = vlaneseq
    %v373 = vshrl.u32 %v372, 7
    %v374 = vsub.s32 2, %v373
    %v375 = vrot.slane %v362, %v374
    %v507 = vunpack.c.l.b16 %v234
    %v508 = vunpack.c.h.b16 %v234
    %v509 = vunpack.c.l.b16 %v235
    %v510 = vunpack.c.l.b16 %v236
    %v511 = vunpack.c.h.b16 %v236
    %v512 = vunpack.c.l.b16 %v237
    %v513 = vunpack.c.l.b16 %v238
    %v514 = vunpack.c.h.b16 %v238
    %v515 = vunpack.c.l.b16 %v239
    %v516 = vunpack.c.l.b16 %v240
    %v517 = vunpack.c.h.b16 %v240
    %v518 = vunpack.c.l.b16 %v241
    %v519 = vunpack.c.l.b16 %v242
    %v520 = vunpack.c.h.b16 %v242
    %v521 = vunpack.c.l.b16 %v243
    %v522 = vunpack.c.l.b16 %v244
    %v523 = vunpack.c.h.b16 %v244
    %v524 = vunpack.c.l.b16 %v245
    %v525 = vunpack.c.l.b16 %v246
    %v526 = vunpack.c.h.b16 %v246
    %v527 = vunpack.c.l.b16 %v247
    %v528 = vunpack.c.l.b16 %v248
    %v529 = vunpack.c.h.b16 %v248
    %v530 = vunpack.c.l.b16 %v249
    %v531 = vunpack.c.l.b16 %v250
    %v532 = vunpack.c.h.b16 %v250
    %v533 = vunpack.c.l.b16 %v251
    %v534 = vunpack.c.l.b16 %v252
    %v535 = vunpack.c.h.b16 %v252
    %v536 = vunpack.c.l.b16 %v253
    %v537 = vunpack.c.l.b16 %v254
    %v538 = vunpack.c.h.b16 %v254
    %v539 = vunpack.c.l.b16 %v255
    %v540 = vunpack.c.l.b16 %v256
    %v541 = vunpack.c.h.b16 %v256
    %v542 = vunpack.c.l.b16 %v257
    %v543 = vunpack.c.l.b16 %v258
    %v544 = vunpack.c.h.b16 %v258
    %v545 = vunpack.c.l.b16 %v259
    %v546 = vunpack.c.l.b16 %v260
    %v547 = vunpack.c.h.b16 %v260
    %v548 = vunpack.c.l.b16 %v261
    %v549 = vunpack.c.l.b16 %v262
    %v550 = vunpack.c.h.b16 %v262
    %v551 = vunpack.c.l.b16 %v263
    %v552 = vunpack.c.l.b16 %v264
    %v553 = vunpack.c.h.b16 %v264
    %v554 = vunpack.c.l.b16 %v265
    %v555 = vunpack.c.l.b16 %v266
    %v556 = vunpack.c.h.b16 %v266
    %v557 = vunpack.c.l.b16 %v267
    %v558 = vunpack.c.l.b16 %v268
    %v559 = vunpack.c.h.b16 %v268
    %v560 = vunpack.c.l.b16 %v269
    %v561 = vunpack.c.l.b16 %v270
    %v562 = vunpack.c.h.b16 %v270
    %v563 = vunpack.c.l.b16 %v271
    %v564 = vunpack.c.l.b16 %v272
    %v565 = vunpack.c.h.b16 %v272
    %v566 = vunpack.c.l.b16 %v273
    %v567 = vunpack.c.l.b16 %v274
    %v568 = vunpack.c.h.b16 %v274
    %v569 = vunpack.c.l.b16 %v275
    %v570 = vunpack.c.l.b16 %v276
    %v571 = vunpack.c.h.b16 %v276
    %v572 = vunpack.c.l.b16 %v277
    %v573 = vunpack.c.l.b16 %v278
    %v574 = vunpack.c.h.b16 %v278
    %v575 = vunpack.c.l.b16 %v279
    %v576 = vunpack.c.l.b16 %v280
    %v577 = vunpack.c.h.b16 %v280
    %v578 = vunpack.c.l.b16 %v281
    %v579 = vunpack.c.l.b16 %v282
    %v580 = vunpack.c.h.b16 %v282
    %v581 = vunpack.c.l.b16 %v283
    %v582 = vunpack.c.l.b16 %v284
    %v583 = vunpack.c.h.b16 %v284
    %v584 = vunpack.c.l.b16 %v285
    %v585 = vunpack.c.l.b16 %v286
    %v586 = vunpack.c.h.b16 %v286
    %v587 = vunpack.c.l.b16 %v287
    %v588 = vunpack.c.l.b16 %v288
    %v589 = vunpack.c.h.b16 %v288
    %v590 = vunpack.c.l.b16 %v289
    %v591 = vunpack.c.l.b16 %v290
    %v592 = vunpack.c.h.b16 %v290
    %v593 = vunpack.c.l.b16 %v291
    %v594 = vunpack.c.l.b16 %v292
    %v595 = vunpack.c.h.b16 %v292
    %v596 = vunpack.c.l.b16 %v293
    %v597 = vunpack.c.l.b16 %v294
    %v598 = vunpack.c.h.b16 %v294
    %v599 = vunpack.c.l.b16 %v295
    %v600 = vunpack.c.l.b16 %v296
    %v601 = vunpack.c.h.b16 %v296
    %v602 = vunpack.c.l.b16 %v297
    %v603 = vunpack.c.l.b16 %v298
    %v604 = vunpack.c.h.b16 %v298
    %v605 = vunpack.c.l.b16 %v299
    %v606 = vunpack.c.l.b16 %v300
    %v607 = vunpack.c.h.b16 %v300
    %v608 = vunpack.c.l.b16 %v301
    %v609 = vunpack.c.l.b16 %v302
    %v610 = vunpack.c.h.b16 %v302
    %v611 = vunpack.c.l.b16 %v303
    %v612 = vunpack.c.l.b16 %v304
    %v613 = vunpack.c.h.b16 %v304
    %v614 = vunpack.c.l.b16 %v305
    %v615 = vunpack.c.l.b16 %v306
    %v616 = vunpack.c.h.b16 %v306
    %v617 = vunpack.c.l.b16 %v307
    %v618 = vunpack.c.l.b16 %v308
    %v619 = vunpack.c.h.b16 %v308
    %v620 = vunpack.c.l.b16 %v309
    %v621 = vunpack.c.l.b16 %v310
    %v622 = vunpack.c.h.b16 %v310
    %v623 = vunpack.c.l.b16 %v311
    %v624 = vunpack.c.l.b16 %v312
    %v625 = vunpack.c.h.b16 %v312
    %v626 = vunpack.c.l.b16 %v313
    %v627 = vunpack.c.l.b16 %v314
    %v628 = vunpack.c.h.b16 %v314
    %v629 = vunpack.c.l.b16 %v315
    %v630 = vunpack.c.l.b16 %v316
    %v631 = vunpack.c.h.b16 %v316
    %v632 = vunpack.c.l.b16 %v317
    %v633 = vunpack.c.l.b16 %v318
    %v634 = vunpack.c.h.b16 %v318
    %v635 = vunpack.c.l.b16 %v319
    %v636 = vunpack.c.l.b16 %v320
    %v637 = vunpack.c.h.b16 %v320
    %v638 = vunpack.c.l.b16 %v321
    %v639 = vunpack.c.l.b16 %v322
    %v640 = vunpack.c.h.b16 %v322
    %v641 = vunpack.c.l.b16 %v323
    %v642 = vunpack.c.l.b16 %v324
    %v643 = vunpack.c.h.b16 %v324
    %v644 = vunpack.c.l.b16 %v325
    %v645 = vunpack.c.l.b16 %v326
    %v646 = vunpack.c.h.b16 %v326
    %v647 = vunpack.c.l.b16 %v327
    %v648 = vunpack.c.l.b16 %v328
    %v649 = vunpack.c.h.b16 %v328
    %v650 = vunpack.c.l.b16 %v329
    %v651 = vunpack.c.l.b16 %v330
    %v652 = vunpack.c.h.b16 %v330
    %v653 = vunpack.c.l.b16 %v331
    %v654 = vunpack.c.l.b16 %v332
    %v655 = vunpack.c.h.b16 %v332
    %v656 = vunpack.c.l.b16 %v333
    %v657 = vunpack.c.l.b16 %v334
    %v658 = vunpack.c.h.b16 %v334
    %v659 = vunpack.c.l.b16 %v335
    %v660 = vunpack.c.l.b16 %v336
    %v661 = vunpack.c.h.b16 %v336
    %v662 = vunpack.c.l.b16 %v337
    %v663 = vunpack.c.l.b16 %v338
    %v664 = vunpack.c.h.b16 %v338
    %v665 = vunpack.c.l.b16 %v339
    %v666 = vunpack.c.l.b16 %v340
    %v667 = vunpack.c.h.b16 %v340
    %v668 = vunpack.c.l.b16 %v341
    %v669 = vunpack.c.l.b16 %v342
    %v670 = vunpack.c.h.b16 %v342
    %v671 = vunpack.c.l.b16 %v343
    %v672 = vunpack.c.l.b16 %v344
    %v673 = vunpack.c.h.b16 %v344
    %v674 = vunpack.c.l.b16 %v345
    %v675 = vunpack.c.l.b16 %v346
    %v676 = vunpack.c.h.b16 %v346
    %v677 = vunpack.c.l.b16 %v347
    %v678 = vunpack.c.l.b16 %v348
    %v679 = vunpack.c.h.b16 %v348
    %v680 = vunpack.c.l.b16 %v349
    %v681 = vunpack.c.l.b16 %v350
    %v682 = vunpack.c.h.b16 %v350
    %v683 = vunpack.c.l.b16 %v351
    %v684 = vunpack.c.l.b16 %v352
    %v685 = vunpack.c.h.b16 %v352
    %v686 = vunpack.c.l.b16 %v353
    %v687 = vunpack.c.l.b16 %v354
    %v688 = vunpack.c.h.b16 %v354
    %v689 = vunpack.c.l.b16 %v355
    %v690 = vunpack.c.l.b16 %v356
    %v691 = vunpack.c.h.b16 %v356
    %v692 = vunpack.c.l.b16 %v357
    %v693 = vunpack.c.l.b16 %v358
    %v694 = vunpack.c.h.b16 %v358
    %v695 = vunpack.c.l.b16 %v359
    %v696 = vunpack.c.l.b16 %v360
    %v697 = vunpack.c.h.b16 %v360
    %v698 = vunpack.c.l.b16 %v361
    %v699 = vpack.c.b16 %v510, %v507
    %v700 = vpack.c.b16 %v511, %v508
    %v701 = vpack.c.b16 %v512, %v509
    %v702 = vpack.c.b16 %v516, %v513
    %v703 = vpack.c.b16 %v517, %v514
    %v704 = vpack.c.b16 %v518, %v515
    %v705 = vpack.c.b16 %v522, %v519
    %v706 = vpack.c.b16 %v523, %v520
    %v707 = vpack.c.b16 %v524, %v521
    %v708 = vpack.c.b16 %v528, %v525
    %v709 = vpack.c.b16 %v529, %v526
    %v710 = vpack.c.b16 %v530, %v527
    %v711 = vpack.c.b16 %v534, %v531
    %v712 = vpack.c.b16 %v535, %v532
    %v713 = vpack.c.b16 %v536, %v533
    %v714 = vpack.c.b16 %v540, %v537
    %v715 = vpack.c.b16 %v541, %v538
    %v716 = vpack.c.b16 %v542, %v539
    %v717 = vpack.c.b16 %v546, %v543
    %v718 = vpack.c.b16 %v547, %v544
    %v719 = vpack.c.b16 %v548, %v545
    %v720 = vpack.c.b16 %v552, %v549
    %v721 = vpack.c.b16 %v553, %v550
    %v722 = vpack.c.b16 %v554, %v551
    %v723 = vpack.c.b16 %v558, %v555
    %v724 = vpack.c.b16 %v559, %v556
    %v725 = vpack.c.b16 %v560, %v557
    %v726 = vpack.c.b16 %v564, %v561
    %v727 = vpack.c.b16 %v565, %v562
    %v728 = vpack.c.b16 %v566, %v563
    %v729 = vpack.c.b16 %v570, %v567
    %v730 = vpack.c.b16 %v571, %v568
    %v731 = vpack.c.b16 %v572, %v569
    %v732 = vpack.c.b16 %v576, %v573
    %v733 = vpack.c.b16 %v577, %v574
    %v734 = vpack.c.b16 %v578, %v575
    %v735 = vpack.c.b16 %v582, %v579
    %v736 = vpack.c.b16 %v583, %v580
    %v737 = vpack.c.b16 %v584, %v581
    %v738 = vpack.c.b16 %v588, %v585
    %v739 = vpack.c.b16 %v589, %v586
    %v740 = vpack.c.b16 %v590, %v587
    %v741 = vpack.c.b16 %v594, %v591
    %v742 = vpack.c.b16 %v595, %v592
    %v743 = vpack.c.b16 %v596, %v593
    %v744 = vpack.c.b16 %v600, %v597
    %v745 = vpack.c.b16 %v601, %v598
    %v746 = vpack.c.b16 %v602, %v599
    %v747 = vpack.c.b16 %v606, %v603
    %v748 = vpack.c.b16 %v607, %v604
    %v749 = vpack.c.b16 %v608, %v605
    %v750 = vpack.c.b16 %v612, %v609
    %v751 = vpack.c.b16 %v613, %v610
    %v752 = vpack.c.b16 %v614, %v611
    %v753 = vpack.c.b16 %v618, %v615
    %v754 = vpack.c.b16 %v619, %v616
    %v755 = vpack.c.b16 %v620, %v617
    %v756 = vpack.c.b16 %v624, %v621
    %v757 = vpack.c.b16 %v625, %v622
    %v758 = vpack.c.b16 %v626, %v623
    %v759 = vpack.c.b16 %v630, %v627
    %v760 = vpack.c.b16 %v631, %v628
    %v761 = vpack.c.b16 %v632, %v629
    %v762 = vpack.c.b16 %v636, %v633
    %v763 = vpack.c.b16 %v637, %v634
    %v764 = vpack.c.b16 %v638, %v635
    %v765 = vpack.c.b16 %v642, %v639
    %v766 = vpack.c.b16 %v643, %v640
    %v767 = vpack.c.b16 %v644, %v641
    %v768 = vpack.c.b16 %v648, %v645
    %v769 = vpack.c.b16 %v649, %v646
    %v770 = vpack.c.b16 %v650, %v647
    %v771 = vpack.c.b16 %v654, %v651
    %v772 = vpack.c.b16 %v655, %v652
    %v773 = vpack.c.b16 %v656, %v653
    %v774 = vpack.c.b16 %v660, %v657
    %v775 = vpack.c.b16 %v661, %v658
    %v776 = vpack.c.b16 %v662, %v659
    %v777 = vpack.c.b16 %v666, %v663
    %v778 = vpack.c.b16 %v667, %v664
    %v779 = vpack.c.b16 %v668, %v665
    %v780 = vpack.c.b16 %v672, %v669
    %v781 = vpack.c.b16 %v673, %v670
    %v782 = vpack.c.b16 %v674, %v671
    %v783 = vpack.c.b16 %v678, %v675
    %v784 = vpack.c.b16 %v679, %v676
    %v785 = vpack.c.b16 %v680, %v677
    %v786 = vpack.c.b16 %v684, %v681
    %v787 = vpack.c.b16 %v685, %v682
    %v788 = vpack.c.b16 %v686, %v683
    %v789 = vpack.c.b16 %v690, %v687
    %v790 = vpack.c.b16 %v691, %v688
    %v791 = vpack.c.b16 %v692, %v689
    %v792 = vpack.c.b16 %v696, %v693
    %v793 = vpack.c.b16 %v697, %v694
    %v794 = vpack.c.b16 %v698, %v695
    %891 = vmatprep.subr.bf16.mxu0 %v700
    %892 = vmatpush1.bf16.msra.mxu0 %v699
    %893 = vmatprep.subr.bf16.mxu0 %v703
    %894 = vmatpush1.bf16.msra.mxu0 %v702
    %895 = vmatprep.subr.bf16.mxu0 %v706
    %896 = vmatpush1.bf16.msra.mxu0 %v705
    %897 = vmatprep.subr.bf16.mxu0 %v709
    %898 = vmatpush1.bf16.msra.mxu0 %v708
    %899 = vmatprep.subr.bf16.mxu0 %v712
    %900 = vmatpush1.bf16.msra.mxu0 %v711
    %901 = vmatprep.subr.bf16.mxu0 %v715
    %902 = vmatpush1.bf16.msra.mxu0 %v714
    %903 = vmatprep.subr.bf16.mxu0 %v718
    %904 = vmatpush1.bf16.msra.mxu0 %v717
    %905 = vmatprep.subr.bf16.mxu0 %v721
    %906 = vmatpush1.bf16.msra.mxu0 %v720
    %907 = vmatprep.subr.bf16.mxu0 %v724
    %908 = vmatpush1.bf16.msra.mxu0 %v723
    %909 = vmatprep.subr.bf16.mxu0 %v727
    %910 = vmatpush1.bf16.msra.mxu0 %v726
    %911 = vmatprep.subr.bf16.mxu0 %v730
    %912 = vmatpush1.bf16.msra.mxu0 %v729
    %913 = vmatprep.subr.bf16.mxu0 %v733
    %914 = vmatpush1.bf16.msra.mxu0 %v732
    %915 = vmatprep.subr.bf16.mxu0 %v736
    %916 = vmatpush1.bf16.msra.mxu0 %v735
    %917 = vmatprep.subr.bf16.mxu0 %v739
    %918 = vmatpush1.bf16.msra.mxu0 %v738
    %919 = vmatprep.subr.bf16.mxu0 %v742
    %920 = vmatpush1.bf16.msra.mxu0 %v741
    %921 = vmatprep.subr.bf16.mxu0 %v745
    %922 = vmatpush1.bf16.msra.mxu0 %v744
    %923 = vmatprep.mubr.bf16.mxu0 %v231
    %924 = vmatmul.mubr.bf16.gmra.mrb[0].mxu0 %v230
    %v925 = vpop.f32.mrb[0].mxu0
    %v926 = vadd.f32 %v367, %v925
    %v927 = vpop.f32.mrb[0].mxu0
    %v928 = vadd.f32 %v371, %v927
    %v929 = vpop.f32.mrb[0].mxu0
    %v930 = vpop.f32.mrb[0].mxu0
    %931 = vdwg.mxu0
    %932 = vmatprep.subr.bf16.mxu0 %v748
    %933 = vmatpush1.bf16.msra.mxu0 %v747
    %934 = vmatprep.subr.bf16.mxu0 %v751
    %935 = vmatpush1.bf16.msra.mxu0 %v750
    %936 = vmatprep.subr.bf16.mxu0 %v754
    %937 = vmatpush1.bf16.msra.mxu0 %v753
    %938 = vmatprep.subr.bf16.mxu0 %v757
    %939 = vmatpush1.bf16.msra.mxu0 %v756
    %940 = vmatprep.subr.bf16.mxu0 %v760
    %941 = vmatpush1.bf16.msra.mxu0 %v759
    %942 = vmatprep.subr.bf16.mxu0 %v763
    %943 = vmatpush1.bf16.msra.mxu0 %v762
    %944 = vmatprep.subr.bf16.mxu0 %v766
    %945 = vmatpush1.bf16.msra.mxu0 %v765
    %946 = vmatprep.subr.bf16.mxu0 %v769
    %947 = vmatpush1.bf16.msra.mxu0 %v768
    %948 = vmatprep.subr.bf16.mxu0 %v772
    %949 = vmatpush1.bf16.msra.mxu0 %v771
    %950 = vmatprep.subr.bf16.mxu0 %v775
    %951 = vmatpush1.bf16.msra.mxu0 %v774
    %952 = vmatprep.subr.bf16.mxu0 %v778
    %953 = vmatpush1.bf16.msra.mxu0 %v777
    %954 = vmatprep.subr.bf16.mxu0 %v781
    %955 = vmatpush1.bf16.msra.mxu0 %v780
    %956 = vmatprep.subr.bf16.mxu0 %v784
    %957 = vmatpush1.bf16.msra.mxu0 %v783
    %958 = vmatprep.subr.bf16.mxu0 %v787
    %959 = vmatpush1.bf16.msra.mxu0 %v786
    %960 = vmatprep.subr.bf16.mxu0 %v790
    %961 = vmatpush1.bf16.msra.mxu0 %v789
    %962 = vmatprep.subr.bf16.mxu0 %v793
    %963 = vmatpush1.bf16.msra.mxu0 %v792
    %964 = vmatprep.mubr.bf16.mxu0 %v233
    %965 = vmatmul.mubr.bf16.gmra.mrb[0].mxu0 %v232
    %v966 = vpop.f32.mrb[0].mxu0
    %v967 = vadd.f32 %v926, %v966
    %v968 = vpop.f32.mrb[0].mxu0
    %v969 = vadd.f32 %v928, %v968
    %v970 = vpop.f32.mrb[0].mxu0
    %v971 = vpop.f32.mrb[0].mxu0
    %972 = vdwg.mxu0
    %973 = vmatprep.subr.bf16.mxu0 0
    %974 = vmatpush1.bf16.msra.mxu0 %v701
    %975 = vmatprep.subr.bf16.mxu0 0
    %976 = vmatpush1.bf16.msra.mxu0 %v704
    %977 = vmatprep.subr.bf16.mxu0 0
    %978 = vmatpush1.bf16.msra.mxu0 %v707
    %979 = vmatprep.subr.bf16.mxu0 0
    %980 = vmatpush1.bf16.msra.mxu0 %v710
    %981 = vmatprep.subr.bf16.mxu0 0
    %982 = vmatpush1.bf16.msra.mxu0 %v713
    %983 = vmatprep.subr.bf16.mxu0 0
    %984 = vmatpush1.bf16.msra.mxu0 %v716
    %985 = vmatprep.subr.bf16.mxu0 0
    %986 = vmatpush1.bf16.msra.mxu0 %v719
    %987 = vmatprep.subr.bf16.mxu0 0
    %988 = vmatpush1.bf16.msra.mxu0 %v722
    %989 = vmatprep.subr.bf16.mxu0 0
    %990 = vmatpush1.bf16.msra.mxu0 %v725
    %991 = vmatprep.subr.bf16.mxu0 0
    %992 = vmatpush1.bf16.msra.mxu0 %v728
    %993 = vmatprep.subr.bf16.mxu0 0
    %994 = vmatpush1.bf16.msra.mxu0 %v731
    %995 = vmatprep.subr.bf16.mxu0 0
    %996 = vmatpush1.bf16.msra.mxu0 %v734
    %997 = vmatprep.subr.bf16.mxu0 0
    %998 = vmatpush1.bf16.msra.mxu0 %v737
    %999 = vmatprep.subr.bf16.mxu0 0
    %1000 = vmatpush1.bf16.msra.mxu0 %v740
    %1001 = vmatprep.subr.bf16.mxu0 0
    %1002 = vmatpush1.bf16.msra.mxu0 %v743
    %1003 = vmatprep.subr.bf16.mxu0 0
    %1004 = vmatpush1.bf16.msra.mxu0 %v746
    %1005 = vmatprep.mubr.bf16.mxu0 %v231
    %1006 = vmatmul.mubr.bf16.gmra.mrb[0].mxu0 %v230
    %v1007 = vpop.f32.mrb[0].mxu0
    %v1008 = vadd.f32 %v375, %v1007
    %v1009 = vpop.f32.mrb[0].mxu0
    %v1010 = vpop.f32.mrb[0].mxu0
    %v1011 = vpop.f32.mrb[0].mxu0
    %1012 = vdwg.mxu0
    %1013 = vmatprep.subr.bf16.mxu0 0
    %1014 = vmatpush1.bf16.msra.mxu0 %v749
    %1015 = vmatprep.subr.bf16.mxu0 0
    %1016 = vmatpush1.bf16.msra.mxu0 %v752
    %1017 = vmatprep.subr.bf16.mxu0 0
    %1018 = vmatpush1.bf16.msra.mxu0 %v755
    %1019 = vmatprep.subr.bf16.mxu0 0
    %1020 = vmatpush1.bf16.msra.mxu0 %v758
    %1021 = vmatprep.subr.bf16.mxu0 0
    %1022 = vmatpush1.bf16.msra.mxu0 %v761
    %1023 = vmatprep.subr.bf16.mxu0 0
    %1024 = vmatpush1.bf16.msra.mxu0 %v764
    %1025 = vmatprep.subr.bf16.mxu0 0
    %1026 = vmatpush1.bf16.msra.mxu0 %v767
    %1027 = vmatprep.subr.bf16.mxu0 0
    %1028 = vmatpush1.bf16.msra.mxu0 %v770
    %1029 = vmatprep.subr.bf16.mxu0 0
    %1030 = vmatpush1.bf16.msra.mxu0 %v773
    %1031 = vmatprep.subr.bf16.mxu0 0
    %1032 = vmatpush1.bf16.msra.mxu0 %v776
    %1033 = vmatprep.subr.bf16.mxu0 0
    %1034 = vmatpush1.bf16.msra.mxu0 %v779
    %1035 = vmatprep.subr.bf16.mxu0 0
    %1036 = vmatpush1.bf16.msra.mxu0 %v782
    %1037 = vmatprep.subr.bf16.mxu0 0
    %1038 = vmatpush1.bf16.msra.mxu0 %v785
    %1039 = vmatprep.subr.bf16.mxu0 0
    %1040 = vmatpush1.bf16.msra.mxu0 %v788
    %1041 = vmatprep.subr.bf16.mxu0 0
    %1042 = vmatpush1.bf16.msra.mxu0 %v791
    %1043 = vmatprep.subr.bf16.mxu0 0
    %1044 = vmatpush1.bf16.msra.mxu0 %v794
    %1045 = vmatprep.mubr.bf16.mxu0 %v233
    %1046 = vmatmul.mubr.bf16.gmra.mrb[0].mxu0 %v232
    %v1047 = vpop.f32.mrb[0].mxu0
    %v1048 = vadd.f32 %v1008, %v1047
    %v1049 = vpop.f32.mrb[0].mxu0
    %v1050 = vpop.f32.mrb[0].mxu0
    %v1051 = vpop.f32.mrb[0].mxu0
    %1052 = vdwg.mxu0
    %v1053 = vmax.f32 %v967, 0.0
    %v1054 = vmax.f32 %v969, 0.0
    %v1055 = vmax.f32 %v1048, 0.0
    %v1056 = vld [vmem:[%s5] sm:$0x7]
    %v1058 = vlaneseq
    %v1059 = vshrl.u32 %v1058, 7
    %v1060 = vsub.s32 0, %v1059
    %v1061 = vrot.slane %v1056, %v1060
    %v1062 = vlaneseq
    %v1063 = vshrl.u32 %v1062, 7
    %v1064 = vsub.s32 1, %v1063
    %v1065 = vrot.slane %v1056, %v1064
    %v1066 = vlaneseq
    %v1067 = vshrl.u32 %v1066, 7
    %v1068 = vsub.s32 2, %v1067
    %v1069 = vrot.slane %v1056, %v1068
    %v1073 = vmul.f32 %v1053, %v1061
    %v1074 = vmul.f32 %v1054, %v1065
    %v1075 = vmul.f32 %v1055, %v1069
    %v1076 = vadd.f32 %v1073, %v1074
    %v1077 = vadd.f32 %v1076, %v1075
    %1078 = vadd.xlane.f32.xlu0 %v1077
    %v1079 = vpop.xlane.xlu0 %1078
    %v1080 = vld [vmem:[#allocation2] sm:$0x1]
    %v1082 = vlaneseq
    %v1083 = vshrl.u32 %v1082, 7
    %v1084 = vsub.s32 0, %v1083
    %v1085 = vrot.slane %v1080, %v1084
    %v1087 = vadd.f32 %v1079, %v1085
    %vm1088 = vcmask 7168
    %1089 = vst.msk [vmem:[%s7] sm:$0xff] %vm1088, %v1087
    // Predicated region
    $region42: #{tpu_custom_call.1} parent=1 // pred_check
      _
    $region43: #{tpu_custom_call.1} parent=1 // pred_check_branch
      %1091 = sbr.rel (0) target = $region45
    $region44: #{tpu_custom_call.1} parent=1 // pred_region
      _
    $region45: #{tpu_custom_call.1} parent=1 // pred_fallthru
      _
    // Predicated region
    $region46: #{tpu_custom_call.1} parent=1 // pred_check
      _
    $region47: #{tpu_custom_call.1} parent=1 // pred_check_branch
      %1093 = sbr.rel (0) target = $region49
    $region48: #{tpu_custom_call.1} parent=1 // pred_region
      _
    $region49: #{tpu_custom_call.1} parent=1 // pred_fallthru
      _
    %1094 = vsyncpa [#allocation4], 1
    %1095 = vsyncpa [#allocation6], 1

</llo_original>
